<compile_context>
chip_gen: v5e
topology: v5e:2x2
jax: 0.10.0
libtpu: 0.0.40
codegen_flags: <defaults>
</compile_context>

<pallas_src>
import jax
import jax.numpy as jnp
from jax.experimental import pallas as pl
from jax.experimental.pallas import tpu as pltpu


def _rdrop_kernel(l1_ref, l2_ref, tgt_ref, out_ref):
    # Upcast once at kernel entry (inputs may be bf16; v5e has no bf16 VPU/EUP).
    l1 = l1_ref[...].astype(jnp.float32)   # [TB, C]
    l2 = l2_ref[...].astype(jnp.float32)   # [TB, C]
    tgt = tgt_ref[...]                     # [TB, 1] int32

    def log_softmax_and_softmax(x):
        m = jnp.max(x, axis=-1, keepdims=True)
        z = x - m
        e = jnp.exp(z)                              # reused for softmax (2 exps total)
        s = jnp.sum(e, axis=-1, keepdims=True)
        lp = z - jnp.log(s)
        p = e * (1.0 / s)                           # [TB,1] divide: tiny + exact
        return lp, p

    lp1, p1 = log_softmax_and_softmax(l1)
    lp2, p2 = log_softmax_and_softmax(l2)

    tb, c = l1.shape
    cls_ids = jax.lax.broadcasted_iota(jnp.int32, (tb, c), 1)
    # Picks lp1[t]+lp2[t] per row without materializing a float one-hot.
    ce_term = jnp.where(cls_ids == tgt, lp1 + lp2, 0.0)

    # loss = 0.5*(ce1+ce2) + 2*(KL(p2||p1) + KL(p1||p2))
    #      = sum_c [ -0.5*onehot*(lp1+lp2) + 2*(p2-p1)*(lp2-lp1) ]
    contrib = -0.5 * ce_term + 2.0 * (p2 - p1) * (lp2 - lp1)
    out_ref[...] = jnp.sum(contrib, axis=-1, keepdims=True)


def _round_up(x, m):
    return (x + m - 1) // m * m


def _pick_tile_b(b, c, in_itemsize):
    # per-row VMEM: 2 logits inputs x 2 pipeline buffers x C x itemsize,
    # plus ~6 live f32 [C]-wide intermediates inside the body.
    per_row = 2 * 2 * c * in_itemsize + 6 * c * 4
    budget = 8 * 1024 * 1024  # conservative: fits default scoped VMEM on v5e/v6e/v7x
    tb = budget // max(per_row, 1)
    tb = max(8, min(512, (tb // 8) * 8))
    return int(min(tb, _round_up(b, 8)))


def rdrop_loss(logits1, logits2, target):
    """logits1, logits2: [B, C] (any float dtype); target: [B] int -> loss [B] f32."""
    B, C = logits1.shape
    in_itemsize = jnp.dtype(logits1.dtype).itemsize
    tb = _pick_tile_b(B, C, in_itemsize)
    b_pad = _round_up(B, tb)

    # Pad ragged batch; padded rows (all-zero logits, target 0) compute finite
    # garbage that is sliced off below.
    if b_pad != B:
        pad = ((0, b_pad - B), (0, 0))
        logits1 = jnp.pad(logits1, pad)
        logits2 = jnp.pad(logits2, pad)
    tgt2d = jnp.pad(target.astype(jnp.int32), (0, b_pad - B)).reshape(b_pad, 1)

    cost = pl.CostEstimate(
        flops=12 * b_pad * C,
        transcendentals=2 * b_pad * C,
        bytes_accessed=2 * b_pad * C * in_itemsize + b_pad * 4 + b_pad * 4,
    )

    # TODO(synk): for vocab-scale C (>=32k) add a second "arbitrary" grid axis
    # over C with online-softmax accumulation in VMEM scratch so TB stays large.
    out = pl.pallas_call(
        _rdrop_kernel,
        out_shape=jax.ShapeDtypeStruct((b_pad, 1), jnp.float32),
        grid=(b_pad // tb,),
        in_specs=[
            pl.BlockSpec((tb, C), lambda i: (i, 0)),
            pl.BlockSpec((tb, C), lambda i: (i, 0)),
            pl.BlockSpec((tb, 1), lambda i: (i, 0)),
        ],
        out_specs=pl.BlockSpec((tb, 1), lambda i: (i, 0)),
        compiler_params=pltpu.CompilerParams(
            dimension_semantics=("parallel",)),
        cost_estimate=cost,
    )(logits1, logits2, tgt2d)
    return out[:B, 0]


def _rdrop_ref(logits1, logits2, target):
    l1 = logits1.astype(jnp.float32)
    l2 = logits2.astype(jnp.float32)
    lp1 = jax.nn.log_softmax(l1, axis=-1)
    lp2 = jax.nn.log_softmax(l2, axis=-1)
    p1, p2 = jnp.exp(lp1), jnp.exp(lp2)
    onehot = jax.nn.one_hot(target, l1.shape[-1], dtype=jnp.float32)
    ce = (-jnp.sum(onehot * lp1, -1) - jnp.sum(onehot * lp2, -1)) * 0.5
    kl1 = jnp.sum(p2 * (lp2 - lp1), -1)
    kl2 = jnp.sum(p1 * (lp1 - lp2), -1)
    return ce + 4.0 * (kl1 + kl2) * 0.5


if __name__ == "__main__":
    key = jax.random.PRNGKey(0)

    # Test 1: f32 logits, batch a multiple of 8.
    B, C = 8, 32
    k1, k2, k3 = jax.random.split(key, 3)
    logits1 = jax.random.normal(k1, (B, C), dtype=jnp.float32)
    logits2 = jax.random.normal(k2, (B, C), dtype=jnp.float32)
    target = jax.random.randint(k3, (B,), 0, C, dtype=jnp.int32)
    loss = jax.block_until_ready(rdrop_loss(logits1, logits2, target))
    ref = _rdrop_ref(logits1, logits2, target)
    assert loss.shape == (B,)
    assert jnp.allclose(loss, ref, atol=1e-4, rtol=1e-5), (loss, ref)

    # Test 2: bf16 logits shipped without wrapper upcast, ragged batch (padding path).
    B2, C2 = 12, 32
    k4, k5, k6 = jax.random.split(k3, 3)
    l1b = jax.random.normal(k4, (B2, C2), dtype=jnp.float32).astype(jnp.bfloat16)
    l2b = jax.random.normal(k5, (B2, C2), dtype=jnp.float32).astype(jnp.bfloat16)
    t2 = jax.random.randint(k6, (B2,), 0, C2, dtype=jnp.int32)
    loss2 = jax.block_until_ready(rdrop_loss(l1b, l2b, t2))
    ref2 = _rdrop_ref(l1b, l2b, t2)
    assert loss2.shape == (B2,)
    assert jnp.allclose(loss2, ref2, atol=1e-4, rtol=1e-5), (loss2, ref2)

    print("KERNEL_OK")
</pallas_src>

<mosaic_0001>
module attributes {stable_mosaic.version = 11 : i64} {
  func.func @_rdrop_kernel(%arg0: i32, %arg1: memref<8x32xf32, #tpu.memory_space<vmem>>, %arg2: memref<8x32xf32, #tpu.memory_space<vmem>>, %arg3: memref<8x1xi32, #tpu.memory_space<vmem>>, %arg4: memref<8x1xf32, #tpu.memory_space<vmem>>) attributes {dimension_semantics = [#tpu.dimension_semantics<parallel>], iteration_bounds = array<i64: 1>, scalar_prefetch = 0 : i64, scratch_operands = 0 : i64, tpu.core_type = #tpu.core_type<tc>, window_params = [{transform_indices = @transform_0, window_bounds = array<i64: 8, 32>}, {transform_indices = @transform_1, window_bounds = array<i64: 8, 32>}, {transform_indices = @transform_2, window_bounds = array<i64: 8, 1>}, {transform_indices = @transform_3, window_bounds = array<i64: 8, 1>}]} {
    %c0 = arith.constant 0 : index
    %c0_0 = arith.constant 0 : index
    %0 = vector.load %arg1[%c0, %c0_0] : memref<8x32xf32, #tpu.memory_space<vmem>>, vector<8x32xf32>
    %c0_1 = arith.constant 0 : index
    %c0_2 = arith.constant 0 : index
    %1 = vector.load %arg2[%c0_1, %c0_2] : memref<8x32xf32, #tpu.memory_space<vmem>>, vector<8x32xf32>
    %c0_3 = arith.constant 0 : index
    %c0_4 = arith.constant 0 : index
    %2 = vector.load %arg3[%c0_3, %c0_4] : memref<8x1xi32, #tpu.memory_space<vmem>>, vector<8x1xi32>
    %cst = arith.constant dense<0xFF800000> : vector<8xf32>
    %3 = vector.multi_reduction <maximumf>, %0, %cst [1] : vector<8x32xf32> to vector<8xf32>
    %4 = vector.shape_cast %3 : vector<8xf32> to vector<8x1xf32>
    %5 = vector.broadcast %4 : vector<8x1xf32> to vector<8x32xf32>
    %6 = arith.subf %0, %5 : vector<8x32xf32>
    %7 = math.exp %6 : vector<8x32xf32>
    %cst_5 = arith.constant dense<0.000000e+00> : vector<8xf32>
    %8 = vector.multi_reduction <add>, %7, %cst_5 [1] : vector<8x32xf32> to vector<8xf32>
    %9 = vector.shape_cast %8 : vector<8xf32> to vector<8x1xf32>
    %10 = math.log %9 : vector<8x1xf32>
    %11 = vector.broadcast %10 : vector<8x1xf32> to vector<8x32xf32>
    %12 = arith.subf %6, %11 : vector<8x32xf32>
    %cst_6 = arith.constant 1.000000e+00 : f32
    %13 = vector.broadcast %cst_6 : f32 to vector<8x1xf32>
    %14 = arith.divf %13, %9 : vector<8x1xf32>
    %15 = vector.broadcast %14 : vector<8x1xf32> to vector<8x32xf32>
    %16 = arith.mulf %7, %15 : vector<8x32xf32>
    %cst_7 = arith.constant dense<0xFF800000> : vector<8xf32>
    %17 = vector.multi_reduction <maximumf>, %1, %cst_7 [1] : vector<8x32xf32> to vector<8xf32>
    %18 = vector.shape_cast %17 : vector<8xf32> to vector<8x1xf32>
    %19 = vector.broadcast %18 : vector<8x1xf32> to vector<8x32xf32>
    %20 = arith.subf %1, %19 : vector<8x32xf32>
    %21 = math.exp %20 : vector<8x32xf32>
    %cst_8 = arith.constant dense<0.000000e+00> : vector<8xf32>
    %22 = vector.multi_reduction <add>, %21, %cst_8 [1] : vector<8x32xf32> to vector<8xf32>
    %23 = vector.shape_cast %22 : vector<8xf32> to vector<8x1xf32>
    %24 = math.log %23 : vector<8x1xf32>
    %25 = vector.broadcast %24 : vector<8x1xf32> to vector<8x32xf32>
    %26 = arith.subf %20, %25 : vector<8x32xf32>
    %cst_9 = arith.constant 1.000000e+00 : f32
    %27 = vector.broadcast %cst_9 : f32 to vector<8x1xf32>
    %28 = arith.divf %27, %23 : vector<8x1xf32>
    %29 = vector.broadcast %28 : vector<8x1xf32> to vector<8x32xf32>
    %30 = arith.mulf %21, %29 : vector<8x32xf32>
    %31 = tpu.iota {dimensions = array<i32: 1>} : vector<8x32xi32>
    %32 = vector.broadcast %2 : vector<8x1xi32> to vector<8x32xi32>
    %33 = arith.cmpi eq, %31, %32 : vector<8x32xi32>
    %34 = arith.addf %12, %26 : vector<8x32xf32>
    %cst_10 = arith.constant 0.000000e+00 : f32
    %35 = vector.broadcast %cst_10 : f32 to vector<8x32xf32>
    %36 = arith.select %33, %34, %35 : vector<8x32xi1>, vector<8x32xf32>
    %cst_11 = arith.constant -5.000000e-01 : f32
    %37 = vector.broadcast %cst_11 : f32 to vector<8x32xf32>
    %38 = arith.mulf %37, %36 : vector<8x32xf32>
    %39 = arith.subf %30, %16 : vector<8x32xf32>
    %cst_12 = arith.constant 2.000000e+00 : f32
    %40 = vector.broadcast %cst_12 : f32 to vector<8x32xf32>
    %41 = arith.mulf %40, %39 : vector<8x32xf32>
    %42 = arith.subf %26, %12 : vector<8x32xf32>
    %43 = arith.mulf %41, %42 : vector<8x32xf32>
    %44 = arith.addf %38, %43 : vector<8x32xf32>
    %cst_13 = arith.constant dense<0.000000e+00> : vector<8xf32>
    %45 = vector.multi_reduction <add>, %44, %cst_13 [1] : vector<8x32xf32> to vector<8xf32>
    %46 = vector.shape_cast %45 : vector<8xf32> to vector<8x1xf32>
    %c0_14 = arith.constant 0 : index
    %c0_15 = arith.constant 0 : index
    %47 = vector.load %arg4[%c0_14, %c0_15] : memref<8x1xf32, #tpu.memory_space<vmem>>, vector<8x1xf32>
    tpu.vector_store %arg4[%c0_14, %c0_15], %46 {strides = array<i32>} : memref<8x1xf32, #tpu.memory_space<vmem>>, vector<8x1xf32>,
    return
  }
  func.func @transform_0(%arg0: i32) -> (i32, i32) {
    %c0_i32 = arith.constant 0 : i32
    %c0_i32_0 = arith.constant 0 : i32
    return %arg0, %c0_i32 : i32, i32
  }
  func.func @transform_1(%arg0: i32) -> (i32, i32) {
    %c0_i32 = arith.constant 0 : i32
    %c0_i32_0 = arith.constant 0 : i32
    return %arg0, %c0_i32 : i32, i32
  }
  func.func @transform_2(%arg0: i32) -> (i32, i32) {
    %c0_i32 = arith.constant 0 : i32
    %c0_i32_0 = arith.constant 0 : i32
    return %arg0, %c0_i32 : i32, i32
  }
  func.func @transform_3(%arg0: i32) -> (i32, i32) {
    %c0_i32 = arith.constant 0 : i32
    %c0_i32_0 = arith.constant 0 : i32
    return %arg0, %c0_i32 : i32, i32
  }
}

</mosaic_0001>

<llo_original>
// kernel: tpu_custom_call.1
$region0: #{tpu_custom_call.1}
  #allocation0 [shape = 'u32[]', space=smem, size = 0x4, offset = 0x4, fixed_abs, tag = 'smem constant byte address 0x4 - core index']
  #allocation1 [shape = 'u32[72,128]{1,0:T(1,128)}', space=vmem, size = 0x9000, scoped, tag = 'internal scratch']
  %s0 = inlined_call_operand.vmem [shape: f32[8,32], index: 0, kind: input, shape index: {}]
  %s1 = inlined_call_operand.hbm [shape: f32[8,32], index: 1, kind: input, shape index: {}]
  %s2 = inlined_call_operand.vmem [shape: s32[8,1], index: 2, kind: input, shape index: {}]
  %s3 = inlined_call_operand.vmem [shape: f32[8,1], index: 3, kind: output, shape index: {}]
  %s4 = sld [smem:[#allocation0]]
  $region26: #{tpu_custom_call.1} parent=0
    _
  %s6 = ssub.s32 1, %s4
  %s7 = scalar_select 0, %s6, %s4
  $region1: #{tpu_custom_call.1} parent=0
    #allocation2 [shape = 'u8[4096]{0}', space=vmem, size = 0x1000, scoped, tag = 'input window, operand 1, single buffered']
    #allocation3 [shape = 's32[1]{0}', space=sflag, size = 0x4, scoped, tag = 'scoped memory for tpu_custom_call.1']
    %8 = vsyncpa [#allocation3], 0
    // Predicated region
    $region2: #{tpu_custom_call.1} parent=1 // pred_check
      _
    $region3: #{tpu_custom_call.1} parent=1 // pred_check_branch
      %10 = sbr.rel (0) target = $region5
    $region4: #{tpu_custom_call.1} parent=1 // pred_region
      _
    $region5: #{tpu_custom_call.1} parent=1 // pred_fallthru
      _
    // Predicated region
    $region6: #{tpu_custom_call.1} parent=1 // pred_check
      _
    $region7: #{tpu_custom_call.1} parent=1 // pred_check_branch
      %12 = sbr.rel (0) target = $region9
    $region8: #{tpu_custom_call.1} parent=1 // pred_region
      %14 = vsyncadd [#allocation3], 0
      %s16 = sshll.u32 %s1, 4
      %s17 = int_to_ptr.hbm [resolvable:$true] %s16
      %s18 = sshll.u32 [#allocation2], 4
      %s19 = int_to_ptr.vmem [resolvable:$true] %s18
      %21 = dma.hbm_to_vmem [thread:$0]  %s17, 128, %s19, [#allocation3]
    $region9: #{tpu_custom_call.1} parent=1 // pred_fallthru
      _
    // Predicated region
    $region10: #{tpu_custom_call.1} parent=1 // pred_check
      _
    $region11: #{tpu_custom_call.1} parent=1 // pred_check_branch
      %23 = sbr.rel (0) target = $region13
    $region12: #{tpu_custom_call.1} parent=1 // pred_region
      _
    $region13: #{tpu_custom_call.1} parent=1 // pred_fallthru
      _
    // Predicated region
    $region14: #{tpu_custom_call.1} parent=1 // pred_check
      _
    $region15: #{tpu_custom_call.1} parent=1 // pred_check_branch
      %25 = sbr.rel (0) target = $region17
    $region16: #{tpu_custom_call.1} parent=1 // pred_region
      %27 = dma.done [#allocation3], 128
    $region17: #{tpu_custom_call.1} parent=1 // pred_fallthru
      _
    %v28 = vld [vmem:[%s0] sm:$0xff]
    %v29 = vld [vmem:[#allocation2] sm:$0xff]
    %v30 = vld [vmem:[%s2] sm:$0xff]
    %vm31 = vcmask 261120
    %v32 = vsel %vm31, %v28, -inf
    %33 = vmax.xlane.f32.xlu0 %v32
    %v34 = vpop.xlane.xlu0 %33
    %v35 = vsub.f32 %v28, %v34
    %v36 = vmul.f32 %v35, 1.442695
    %v37 = vpow.pop %v36
    %v38 = vsel %vm31, %v37, 0.0
    %39 = vadd.xlane.f32.xlu0 %v38
    %v40 = vpop.xlane.xlu0 %39
    %v41 = vlog2.pop %v40
    %v42 = vmul.f32 %v41, 0.6931472
    %v43 = vsub.f32 %v35, %v42
    %v44 = vrcp.pop %v40
    %v45 = vmul.f32 %v40, %v44
    %v46 = vsub.f32 1.0, %v45
    %v47 = vmul.f32 %v44, %v46
    %v48 = vadd.f32 %v44, %v47
    %vm49 = vweird.f32 %v40
    %vm50 = vweird.f32 %v44
    %vm51 = vmor %vm49, %vm50
    %v52 = vsel %vm51, %v44, %v48
    %v53 = vand.u32 2147483647, %v40
    %vm54 = vcmp.eq.f32.partialorder %v53, 8.507059e+37
    %v55 = vand.u32 %v40, 2147483648
    %v56 = vor.u32 1.1754944e-38, %v55
    %v57 = vsel %vm54, %v56, %v52
    %v58 = vmul.f32 1.0, %v57
    %v59 = vmul.f32 %v37, %v58
    %v60 = vsel %vm31, %v29, -inf
    %61 = vmax.xlane.f32.xlu0 %v60
    %v62 = vpop.xlane.xlu0 %61
    %v63 = vsub.f32 %v29, %v62
    %v64 = vmul.f32 %v63, 1.442695
    %v65 = vpow.pop %v64
    %v66 = vsel %vm31, %v65, 0.0
    %67 = vadd.xlane.f32.xlu0 %v66
    %v68 = vpop.xlane.xlu0 %67
    %v69 = vlog2.pop %v68
    %v70 = vmul.f32 %v69, 0.6931472
    %v71 = vsub.f32 %v63, %v70
    %v72 = vrcp.pop %v68
    %v73 = vmul.f32 %v68, %v72
    %v74 = vsub.f32 1.0, %v73
    %v75 = vmul.f32 %v72, %v74
    %v76 = vadd.f32 %v72, %v75
    %vm77 = vweird.f32 %v68
    %vm78 = vweird.f32 %v72
    %vm79 = vmor %vm77, %vm78
    %v80 = vsel %vm79, %v72, %v76
    %v81 = vand.u32 2147483647, %v68
    %vm82 = vcmp.eq.f32.partialorder %v81, 8.507059e+37
    %v83 = vand.u32 %v68, 2147483648
    %v84 = vor.u32 1.1754944e-38, %v83
    %v85 = vsel %vm82, %v84, %v80
    %v86 = vmul.f32 1.0, %v85
    %v87 = vmul.f32 %v65, %v86
    %v88 = vlaneseq
    %v89 = vand.u32 %v88, 127
    %90 = vset.pattern.permute.xlu0 0
    %91 = vperm.xlu0 %90, %v30
    %v92 = vpop.permute.xlu0 %91
    %vm93 = vcmp.eq.s32.totalorder %v89, %v92
    %v94 = vadd.f32 %v43, %v71
    %v95 = vsel %vm93, %v94, 0.0
    %v96 = vmul.f32 %v95, -0.5
    %v97 = vsub.f32 %v87, %v59
    %v98 = vmul.f32 %v97, 2.0
    %v99 = vsub.f32 %v71, %v43
    %v100 = vmul.f32 %v98, %v99
    %v101 = vadd.f32 %v96, %v100
    %v102 = vsel %vm31, %v101, 0.0
    %103 = vadd.xlane.f32.xlu0 %v102
    %v104 = vpop.xlane.xlu0 %103
    %vm105 = vcmask 7168
    %106 = vst.msk [vmem:[%s3] sm:$0xff] %vm105, %v104
    // Predicated region
    $region18: #{tpu_custom_call.1} parent=1 // pred_check
      _
    $region19: #{tpu_custom_call.1} parent=1 // pred_check_branch
      %108 = sbr.rel (0) target = $region21
    $region20: #{tpu_custom_call.1} parent=1 // pred_region
      _
    $region21: #{tpu_custom_call.1} parent=1 // pred_fallthru
      _
    // Predicated region
    $region22: #{tpu_custom_call.1} parent=1 // pred_check
      _
    $region23: #{tpu_custom_call.1} parent=1 // pred_check_branch
      %110 = sbr.rel (0) target = $region25
    $region24: #{tpu_custom_call.1} parent=1 // pred_region
      _
    $region25: #{tpu_custom_call.1} parent=1 // pred_fallthru
      _
    %111 = vsyncpa [#allocation3], 1

</llo_original>
